<compile_context>
chip_gen: v7x
topology: tpu7x:2x2x1
jax: 0.10.0
libtpu: 0.0.40
codegen_flags: <defaults>
</compile_context>

<pallas_src>
import jax
import jax.numpy as jnp
from jax.experimental import pallas as pl
from jax.experimental.pallas import tpu as pltpu

LN_EPS = 1e-5          # torch.nn.LayerNorm default
LEAKY_SLOPE = 0.01     # torch.nn.LeakyReLU default
H1 = 256
H2 = 128


def _round_up(x, m):
    return ((x + m - 1) // m) * m


def _cdiv(a, b):
    return (a + b - 1) // b


def _layernorm(h, gamma, beta):
    """Centered-variance LayerNorm (matches torch.nn.LayerNorm numerics)."""
    mean = jnp.mean(h, axis=-1, keepdims=True)
    d = h - mean
    var = jnp.mean(d * d, axis=-1, keepdims=True)
    return d * jax.lax.rsqrt(var + LN_EPS) * gamma + beta


def _leaky_relu(h):
    return jnp.where(h > 0, h, LEAKY_SLOPE * h)


def ppo_actor_kernel(x_ref,
                     w1_ref, b1_ref, g1_ref, be1_ref,
                     w2_ref, b2_ref, g2_ref, be2_ref,
                     w3_ref, b3_ref,
                     mu_ref):
    # Matmul-operand dtype (f32 or bf16); accumulation is always f32 and all
    # elementwise math between the dots stays f32.
    cdt = w1_ref.dtype

    # Linear(in, 256) + LayerNorm(256) + LeakyReLU
    h = jnp.dot(x_ref[...], w1_ref[...], preferred_element_type=jnp.float32)
    h = h + b1_ref[...]
    h = _leaky_relu(_layernorm(h, g1_ref[...], be1_ref[...]))

    # Linear(256, 128) + LayerNorm(128) + LeakyReLU
    h = jnp.dot(h.astype(cdt), w2_ref[...], preferred_element_type=jnp.float32)
    h = h + b2_ref[...]
    h = _leaky_relu(_layernorm(h, g2_ref[...], be2_ref[...]))

    # mu head: Linear(128, mu_pad) (lane-padded; extra columns sliced in wrapper)
    mu = jnp.dot(h.astype(cdt), w3_ref[...], preferred_element_type=jnp.float32)
    mu_ref[...] = (mu + b3_ref[...]).astype(mu_ref.dtype)


def ppo_actor_forward(x, params, *, use_bf16=True,
                      stream_budget_bytes=24 << 20):
    """Fused PPO_ACTOR forward.

    x: (B, input_size) float32
    returns: mu (B, n_actions) float32, std (n_actions,) float32
    """
    B, input_size = x.shape
    n_actions = params["w3"].shape[1]

    stream_dtype = jnp.bfloat16 if use_bf16 else jnp.float32
    x_bytes = 2 if use_bf16 else 4

    k_pad = _round_up(input_size, 128)          # lane-dense x / first-matmul K
    mu_pad = _round_up(n_actions, 128)          # lane-dense mu head

    # --- parameter prep: pad to lane-dense shapes, cast matmul operands ------
    w1 = params["w1"]
    if k_pad != input_size:
        w1 = jnp.pad(w1, ((0, k_pad - input_size), (0, 0)))
    w3, b3 = params["w3"], params["b3"]
    if mu_pad != n_actions:
        w3 = jnp.pad(w3, ((0, 0), (0, mu_pad - n_actions)))
        b3 = jnp.pad(b3, ((0, 0), (0, mu_pad - n_actions)))
    w1 = w1.astype(stream_dtype)
    w2 = params["w2"].astype(stream_dtype)
    w3 = w3.astype(stream_dtype)

    if k_pad != input_size:
        x = jnp.pad(x, ((0, 0), (0, k_pad - input_size)))
    x = x.astype(stream_dtype)

    # --- batch tiling: VMEM-budgeted, balanced, >=2 tiles when B allows ------
    # Per-row streamed bytes: double-buffered x tile + double-buffered mu tile.
    per_row_stream = 2 * (k_pad * x_bytes + mu_pad * 4)
    tb_max = max(8, (stream_budget_bytes // per_row_stream) // 8 * 8)
    tb_max = min(tb_max, 4096)                  # diminishing returns past this
    num_tiles = _cdiv(B, tb_max)
    if num_tiles == 1 and B >= 16:
        num_tiles = 2                           # v7x: feed both TensorCores
    tb = _round_up(_cdiv(B, num_tiles), 8)
    b_pad = num_tiles * tb
    if b_pad != B:
        # Zero rows pass harmlessly through LN/LeakyReLU and are sliced off.
        x = jnp.pad(x, ((0, b_pad - B), (0, 0)))

    grid = (num_tiles,)

    # --- explicit scoped-VMEM limit (default 16/32 MiB is below what big
    #     tiles need; keep the cap safe for v7x's 64 MiB physical VMEM) -------
    weight_bytes = (k_pad * H1 + H1 * H2 + H2 * mu_pad) * x_bytes
    param_bytes = (3 * H1 + 3 * H2 + mu_pad) * 4
    working_set = 2 * (weight_bytes + param_bytes) + tb * per_row_stream
    vmem_limit = int(min(48 << 20, max(32 << 20, working_set * 3 // 2)))

    def batch_spec(shape):
        return pl.BlockSpec(shape, lambda i: (i, 0))

    def resident(shape):
        # Constant index_map: the block stays resident across grid steps, so
        # the parameters are DMA'd into VMEM only once.
        return pl.BlockSpec(shape, lambda i: (0, 0))

    flops = 2 * b_pad * (k_pad * H1 + H1 * H2 + H2 * mu_pad)
    bytes_accessed = (
        b_pad * k_pad * x_bytes        # x stream
        + weight_bytes + param_bytes   # parameters (once)
        + b_pad * mu_pad * 4           # mu output
    )

    mu_full = pl.pallas_call(
        ppo_actor_kernel,
        out_shape=jax.ShapeDtypeStruct((b_pad, mu_pad), jnp.float32),
        grid=grid,
        in_specs=[
            batch_spec((tb, k_pad)),
            resident((k_pad, H1)), resident((1, H1)),
            resident((1, H1)), resident((1, H1)),
            resident((H1, H2)), resident((1, H2)),
            resident((1, H2)), resident((1, H2)),
            resident((H2, mu_pad)), resident((1, mu_pad)),
        ],
        out_specs=batch_spec((tb, mu_pad)),
        compiler_params=pltpu.CompilerParams(
            dimension_semantics=("parallel",),
            vmem_limit_bytes=vmem_limit),
        cost_estimate=pl.CostEstimate(
            flops=flops,
            transcendentals=2 * b_pad,          # two rsqrt per row
            bytes_accessed=bytes_accessed),
    )(
        x,
        w1, params["b1"], params["g1"], params["be1"],
        w2, params["b2"], params["g2"], params["be2"],
        w3, b3,
    )

    mu = mu_full[:B, :n_actions]
    # std = exp(log_std): batch-independent, hoisted out of the kernel.
    std = jnp.exp(params["log_std"]).reshape((n_actions,))
    return mu, std


def init_params(key, input_size, n_actions, dtype=jnp.float32):
    """PyTorch-style init: Linear uniform(-1/sqrt(fan_in), 1/sqrt(fan_in)),
    LayerNorm gamma=1 / beta=0, log_std = zeros."""
    ks = jax.random.split(key, 6)

    def lin(kw, kb, fan_in, fan_out):
        bound = 1.0 / jnp.sqrt(fan_in)
        w = jax.random.uniform(kw, (fan_in, fan_out), dtype, -bound, bound)
        b = jax.random.uniform(kb, (1, fan_out), dtype, -bound, bound)
        return w, b

    w1, b1 = lin(ks[0], ks[1], input_size, H1)
    w2, b2 = lin(ks[2], ks[3], H1, H2)
    w3, b3 = lin(ks[4], ks[5], H2, n_actions)

    return dict(
        w1=w1, b1=b1, g1=jnp.ones((1, H1), dtype), be1=jnp.zeros((1, H1), dtype),
        w2=w2, b2=b2, g2=jnp.ones((1, H2), dtype), be2=jnp.zeros((1, H2), dtype),
        w3=w3, b3=b3, log_std=jnp.zeros((n_actions,), dtype),
    )


def ppo_actor_reference(x, params):
    """Pure-JAX f32 reference (same math as torch.nn.LayerNorm)."""
    h = x @ params["w1"] + params["b1"]
    h = _leaky_relu(_layernorm(h, params["g1"], params["be1"]))
    h = h @ params["w2"] + params["b2"]
    h = _leaky_relu(_layernorm(h, params["g2"], params["be2"]))
    mu = h @ params["w3"] + params["b3"]
    std = jnp.exp(params["log_std"]).reshape(-1)
    return mu, std


if __name__ == "__main__":
    key = jax.random.PRNGKey(0)
    k_x, k_p = jax.random.split(key)

    batch = 2
    input_size = 32
    n_actions = 8

    x = jax.random.normal(k_x, (batch, input_size), jnp.float32)
    params = init_params(k_p, input_size, n_actions)

    mu_ref, std_ref = ppo_actor_reference(x, params)

    # f32 path: validates the kernel structure / LayerNorm numerics tightly.
    mu32, std32 = ppo_actor_forward(x, params, use_bf16=False)
    mu32 = jax.block_until_ready(mu32)
    std32 = jax.block_until_ready(std32)
    assert mu32.shape == (batch, n_actions)
    assert std32.shape == (n_actions,)
    assert jnp.allclose(mu32, mu_ref, atol=1e-3, rtol=1e-3)
    assert jnp.allclose(std32, std_ref, atol=1e-6, rtol=1e-6)

    # bf16-streaming path (default perf path): f32 accumulation, looser check.
    mu16, std16 = ppo_actor_forward(x, params, use_bf16=True)
    mu16 = jax.block_until_ready(mu16)
    std16 = jax.block_until_ready(std16)
    assert mu16.shape == (batch, n_actions)
    assert jnp.allclose(mu16, mu_ref, atol=1e-1, rtol=1e-1)
    assert jnp.allclose(std16, std_ref, atol=1e-6, rtol=1e-6)

    print("KERNEL_OK")
</pallas_src>

<mosaic_0001>
module attributes {stable_mosaic.version = 11 : i64} {
  func.func @ppo_actor_kernel(%arg0: i32, %arg1: memref<8x128xf32, #tpu.memory_space<vmem>>, %arg2: memref<128x256xf32, #tpu.memory_space<vmem>>, %arg3: memref<1x256xf32, #tpu.memory_space<vmem>>, %arg4: memref<1x256xf32, #tpu.memory_space<vmem>>, %arg5: memref<1x256xf32, #tpu.memory_space<vmem>>, %arg6: memref<256x128xf32, #tpu.memory_space<vmem>>, %arg7: memref<1x128xf32, #tpu.memory_space<vmem>>, %arg8: memref<1x128xf32, #tpu.memory_space<vmem>>, %arg9: memref<1x128xf32, #tpu.memory_space<vmem>>, %arg10: memref<128x128xf32, #tpu.memory_space<vmem>>, %arg11: memref<1x128xf32, #tpu.memory_space<vmem>>, %arg12: memref<8x128xf32, #tpu.memory_space<vmem>>) attributes {dimension_semantics = [#tpu.dimension_semantics<parallel>], iteration_bounds = array<i64: 1>, scalar_prefetch = 0 : i64, scratch_operands = 0 : i64, tpu.core_type = #tpu.core_type<tc>, window_params = [{transform_indices = @transform_0, window_bounds = array<i64: 8, 128>}, {pipeline_mode = #tpu.pipeline_mode<synchronous>, transform_indices = @transform_1, window_bounds = array<i64: 128, 256>}, {pipeline_mode = #tpu.pipeline_mode<synchronous>, transform_indices = @transform_2, window_bounds = array<i64: 1, 256>}, {pipeline_mode = #tpu.pipeline_mode<synchronous>, transform_indices = @transform_3, window_bounds = array<i64: 1, 256>}, {pipeline_mode = #tpu.pipeline_mode<synchronous>, transform_indices = @transform_4, window_bounds = array<i64: 1, 256>}, {pipeline_mode = #tpu.pipeline_mode<synchronous>, transform_indices = @transform_5, window_bounds = array<i64: 256, 128>}, {pipeline_mode = #tpu.pipeline_mode<synchronous>, transform_indices = @transform_6, window_bounds = array<i64: 1, 128>}, {pipeline_mode = #tpu.pipeline_mode<synchronous>, transform_indices = @transform_7, window_bounds = array<i64: 1, 128>}, {pipeline_mode = #tpu.pipeline_mode<synchronous>, transform_indices = @transform_8, window_bounds = array<i64: 1, 128>}, {pipeline_mode = #tpu.pipeline_mode<synchronous>, transform_indices = @transform_9, window_bounds = array<i64: 128, 128>}, {pipeline_mode = #tpu.pipeline_mode<synchronous>, transform_indices = @transform_10, window_bounds = array<i64: 1, 128>}, {transform_indices = @transform_11, window_bounds = array<i64: 8, 128>}]} {
    %c0 = arith.constant 0 : index
    %c0_0 = arith.constant 0 : index
    %0 = vector.load %arg1[%c0, %c0_0] : memref<8x128xf32, #tpu.memory_space<vmem>>, vector<8x128xf32>
    %c0_1 = arith.constant 0 : index
    %c0_2 = arith.constant 0 : index
    %1 = vector.load %arg2[%c0_1, %c0_2] : memref<128x256xf32, #tpu.memory_space<vmem>>, vector<128x256xf32>
    %cst = arith.constant dense<0.000000e+00> : vector<8x256xf32>
    %2 = tpu.matmul %0, %1, %cst {dimension_numbers = #tpu.dot_dimension_numbers<[1], [0], [0], [1], [0, 0, 1, 1], [], []>} : vector<8x128xf32>, vector<128x256xf32>, vector<8x256xf32> -> vector<8x256xf32>
    %c0_3 = arith.constant 0 : index
    %c0_4 = arith.constant 0 : index
    %3 = vector.load %arg3[%c0_3, %c0_4] : memref<1x256xf32, #tpu.memory_space<vmem>>, vector<1x256xf32>
    %4 = vector.broadcast %3 : vector<1x256xf32> to vector<8x256xf32>
    %5 = arith.addf %2, %4 : vector<8x256xf32>
    %c0_5 = arith.constant 0 : index
    %c0_6 = arith.constant 0 : index
    %6 = vector.load %arg4[%c0_5, %c0_6] : memref<1x256xf32, #tpu.memory_space<vmem>>, vector<1x256xf32>
    %c0_7 = arith.constant 0 : index
    %c0_8 = arith.constant 0 : index
    %7 = vector.load %arg5[%c0_7, %c0_8] : memref<1x256xf32, #tpu.memory_space<vmem>>, vector<1x256xf32>
    %cst_9 = arith.constant dense<0.000000e+00> : vector<8xf32>
    %8 = vector.multi_reduction <add>, %5, %cst_9 [1] : vector<8x256xf32> to vector<8xf32>
    %9 = vector.shape_cast %8 : vector<8xf32> to vector<8x1xf32>
    %cst_10 = arith.constant 2.560000e+02 : f32
    %10 = vector.broadcast %cst_10 : f32 to vector<8x1xf32>
    %11 = arith.divf %9, %10 : vector<8x1xf32>
    %12 = vector.broadcast %11 : vector<8x1xf32> to vector<8x256xf32>
    %13 = arith.subf %5, %12 : vector<8x256xf32>
    %14 = arith.mulf %13, %13 : vector<8x256xf32>
    %cst_11 = arith.constant dense<0.000000e+00> : vector<8xf32>
    %15 = vector.multi_reduction <add>, %14, %cst_11 [1] : vector<8x256xf32> to vector<8xf32>
    %16 = vector.shape_cast %15 : vector<8xf32> to vector<8x1xf32>
    %cst_12 = arith.constant 2.560000e+02 : f32
    %17 = vector.broadcast %cst_12 : f32 to vector<8x1xf32>
    %18 = arith.divf %16, %17 : vector<8x1xf32>
    %cst_13 = arith.constant 9.99999974E-6 : f32
    %19 = vector.broadcast %cst_13 : f32 to vector<8x1xf32>
    %20 = arith.addf %18, %19 : vector<8x1xf32>
    %21 = math.rsqrt %20 : vector<8x1xf32>
    %22 = vector.broadcast %21 : vector<8x1xf32> to vector<8x256xf32>
    %23 = arith.mulf %13, %22 : vector<8x256xf32>
    %24 = vector.broadcast %6 : vector<1x256xf32> to vector<8x256xf32>
    %25 = arith.mulf %23, %24 : vector<8x256xf32>
    %26 = vector.broadcast %7 : vector<1x256xf32> to vector<8x256xf32>
    %27 = arith.addf %25, %26 : vector<8x256xf32>
    %cst_14 = arith.constant 0.000000e+00 : f32
    %28 = vector.broadcast %cst_14 : f32 to vector<8x256xf32>
    %29 = arith.cmpf ogt, %27, %28 : vector<8x256xf32>
    %cst_15 = arith.constant 0.00999999977 : f32
    %30 = vector.broadcast %cst_15 : f32 to vector<8x256xf32>
    %31 = arith.mulf %30, %27 : vector<8x256xf32>
    %32 = arith.select %29, %27, %31 : vector<8x256xi1>, vector<8x256xf32>
    %c0_16 = arith.constant 0 : index
    %c0_17 = arith.constant 0 : index
    %33 = vector.load %arg6[%c0_16, %c0_17] : memref<256x128xf32, #tpu.memory_space<vmem>>, vector<256x128xf32>
    %cst_18 = arith.constant dense<0.000000e+00> : vector<8x128xf32>
    %34 = tpu.matmul %32, %33, %cst_18 {dimension_numbers = #tpu.dot_dimension_numbers<[1], [0], [0], [1], [0, 0, 1, 1], [], []>} : vector<8x256xf32>, vector<256x128xf32>, vector<8x128xf32> -> vector<8x128xf32>
    %c0_19 = arith.constant 0 : index
    %c0_20 = arith.constant 0 : index
    %35 = vector.load %arg7[%c0_19, %c0_20] : memref<1x128xf32, #tpu.memory_space<vmem>>, vector<1x128xf32>
    %36 = vector.broadcast %35 : vector<1x128xf32> to vector<8x128xf32>
    %37 = arith.addf %34, %36 : vector<8x128xf32>
    %c0_21 = arith.constant 0 : index
    %c0_22 = arith.constant 0 : index
    %38 = vector.load %arg8[%c0_21, %c0_22] : memref<1x128xf32, #tpu.memory_space<vmem>>, vector<1x128xf32>
    %c0_23 = arith.constant 0 : index
    %c0_24 = arith.constant 0 : index
    %39 = vector.load %arg9[%c0_23, %c0_24] : memref<1x128xf32, #tpu.memory_space<vmem>>, vector<1x128xf32>
    %cst_25 = arith.constant dense<0.000000e+00> : vector<8xf32>
    %40 = vector.multi_reduction <add>, %37, %cst_25 [1] : vector<8x128xf32> to vector<8xf32>
    %41 = vector.shape_cast %40 : vector<8xf32> to vector<8x1xf32>
    %cst_26 = arith.constant 1.280000e+02 : f32
    %42 = vector.broadcast %cst_26 : f32 to vector<8x1xf32>
    %43 = arith.divf %41, %42 : vector<8x1xf32>
    %44 = vector.broadcast %43 : vector<8x1xf32> to vector<8x128xf32>
    %45 = arith.subf %37, %44 : vector<8x128xf32>
    %46 = arith.mulf %45, %45 : vector<8x128xf32>
    %cst_27 = arith.constant dense<0.000000e+00> : vector<8xf32>
    %47 = vector.multi_reduction <add>, %46, %cst_27 [1] : vector<8x128xf32> to vector<8xf32>
    %48 = vector.shape_cast %47 : vector<8xf32> to vector<8x1xf32>
    %cst_28 = arith.constant 1.280000e+02 : f32
    %49 = vector.broadcast %cst_28 : f32 to vector<8x1xf32>
    %50 = arith.divf %48, %49 : vector<8x1xf32>
    %cst_29 = arith.constant 9.99999974E-6 : f32
    %51 = vector.broadcast %cst_29 : f32 to vector<8x1xf32>
    %52 = arith.addf %50, %51 : vector<8x1xf32>
    %53 = math.rsqrt %52 : vector<8x1xf32>
    %54 = vector.broadcast %53 : vector<8x1xf32> to vector<8x128xf32>
    %55 = arith.mulf %45, %54 : vector<8x128xf32>
    %56 = vector.broadcast %38 : vector<1x128xf32> to vector<8x128xf32>
    %57 = arith.mulf %55, %56 : vector<8x128xf32>
    %58 = vector.broadcast %39 : vector<1x128xf32> to vector<8x128xf32>
    %59 = arith.addf %57, %58 : vector<8x128xf32>
    %cst_30 = arith.constant 0.000000e+00 : f32
    %60 = vector.broadcast %cst_30 : f32 to vector<8x128xf32>
    %61 = arith.cmpf ogt, %59, %60 : vector<8x128xf32>
    %cst_31 = arith.constant 0.00999999977 : f32
    %62 = vector.broadcast %cst_31 : f32 to vector<8x128xf32>
    %63 = arith.mulf %62, %59 : vector<8x128xf32>
    %64 = arith.select %61, %59, %63 : vector<8x128xi1>, vector<8x128xf32>
    %c0_32 = arith.constant 0 : index
    %c0_33 = arith.constant 0 : index
    %65 = vector.load %arg10[%c0_32, %c0_33] : memref<128x128xf32, #tpu.memory_space<vmem>>, vector<128x128xf32>
    %cst_34 = arith.constant dense<0.000000e+00> : vector<8x128xf32>
    %66 = tpu.matmul %64, %65, %cst_34 {dimension_numbers = #tpu.dot_dimension_numbers<[1], [0], [0], [1], [0, 0, 1, 1], [], []>} : vector<8x128xf32>, vector<128x128xf32>, vector<8x128xf32> -> vector<8x128xf32>
    %c0_35 = arith.constant 0 : index
    %c0_36 = arith.constant 0 : index
    %67 = vector.load %arg11[%c0_35, %c0_36] : memref<1x128xf32, #tpu.memory_space<vmem>>, vector<1x128xf32>
    %68 = vector.broadcast %67 : vector<1x128xf32> to vector<8x128xf32>
    %69 = arith.addf %66, %68 : vector<8x128xf32>
    %c0_37 = arith.constant 0 : index
    %c0_38 = arith.constant 0 : index
    %70 = vector.load %arg12[%c0_37, %c0_38] : memref<8x128xf32, #tpu.memory_space<vmem>>, vector<8x128xf32>
    tpu.vector_store %arg12[%c0_37, %c0_38], %69 {strides = array<i32>} : memref<8x128xf32, #tpu.memory_space<vmem>>, vector<8x128xf32>,
    return
  }
  func.func @transform_0(%arg0: i32) -> (i32, i32) {
    %c0_i32 = arith.constant 0 : i32
    %c0_i32_0 = arith.constant 0 : i32
    return %arg0, %c0_i32 : i32, i32
  }
  func.func @transform_1(%arg0: i32) -> (i32, i32) {
    %c0_i32 = arith.constant 0 : i32
    %c0_i32_0 = arith.constant 0 : i32
    %c0_i32_1 = arith.constant 0 : i32
    return %c0_i32, %c0_i32_0 : i32, i32
  }
  func.func @transform_2(%arg0: i32) -> (i32, i32) {
    %c0_i32 = arith.constant 0 : i32
    %c0_i32_0 = arith.constant 0 : i32
    %c0_i32_1 = arith.constant 0 : i32
    return %c0_i32, %c0_i32_0 : i32, i32
  }
  func.func @transform_3(%arg0: i32) -> (i32, i32) {
    %c0_i32 = arith.constant 0 : i32
    %c0_i32_0 = arith.constant 0 : i32
    %c0_i32_1 = arith.constant 0 : i32
    return %c0_i32, %c0_i32_0 : i32, i32
  }
  func.func @transform_4(%arg0: i32) -> (i32, i32) {
    %c0_i32 = arith.constant 0 : i32
    %c0_i32_0 = arith.constant 0 : i32
    %c0_i32_1 = arith.constant 0 : i32
    return %c0_i32, %c0_i32_0 : i32, i32
  }
  func.func @transform_5(%arg0: i32) -> (i32, i32) {
    %c0_i32 = arith.constant 0 : i32
    %c0_i32_0 = arith.constant 0 : i32
    %c0_i32_1 = arith.constant 0 : i32
    return %c0_i32, %c0_i32_0 : i32, i32
  }
  func.func @transform_6(%arg0: i32) -> (i32, i32) {
    %c0_i32 = arith.constant 0 : i32
    %c0_i32_0 = arith.constant 0 : i32
    %c0_i32_1 = arith.constant 0 : i32
    return %c0_i32, %c0_i32_0 : i32, i32
  }
  func.func @transform_7(%arg0: i32) -> (i32, i32) {
    %c0_i32 = arith.constant 0 : i32
    %c0_i32_0 = arith.constant 0 : i32
    %c0_i32_1 = arith.constant 0 : i32
    return %c0_i32, %c0_i32_0 : i32, i32
  }
  func.func @transform_8(%arg0: i32) -> (i32, i32) {
    %c0_i32 = arith.constant 0 : i32
    %c0_i32_0 = arith.constant 0 : i32
    %c0_i32_1 = arith.constant 0 : i32
    return %c0_i32, %c0_i32_0 : i32, i32
  }
  func.func @transform_9(%arg0: i32) -> (i32, i32) {
    %c0_i32 = arith.constant 0 : i32
    %c0_i32_0 = arith.constant 0 : i32
    %c0_i32_1 = arith.constant 0 : i32
    return %c0_i32, %c0_i32_0 : i32, i32
  }
  func.func @transform_10(%arg0: i32) -> (i32, i32) {
    %c0_i32 = arith.constant 0 : i32
    %c0_i32_0 = arith.constant 0 : i32
    %c0_i32_1 = arith.constant 0 : i32
    return %c0_i32, %c0_i32_0 : i32, i32
  }
  func.func @transform_11(%arg0: i32) -> (i32, i32) {
    %c0_i32 = arith.constant 0 : i32
    %c0_i32_0 = arith.constant 0 : i32
    return %arg0, %c0_i32 : i32, i32
  }
}

</mosaic_0001>

<llo_original>
// kernel: tpu_custom_call.1
$region0: #{tpu_custom_call.1}
  #allocation0 [shape = 'u32[]', space=smem, size = 0x4, offset = 0x4, fixed_abs, tag = 'smem constant byte address 0x4 - core index']
  #allocation1 [shape = 'u32[144,128]{1,0:T(1,128)}', space=vmem, size = 0x12000, scoped, tag = 'internal scratch']
  %s0 = inlined_call_operand.hbm [shape: f32[8,128], index: 0, kind: input, shape index: {}]
  %s1 = inlined_call_operand.hbm [shape: f32[128,256], index: 1, kind: input, shape index: {}]
  %s2 = inlined_call_operand.vmem [shape: f32[1,256], index: 2, kind: input, shape index: {}]
  %s3 = inlined_call_operand.vmem [shape: f32[1,256], index: 3, kind: input, shape index: {}]
  %s4 = inlined_call_operand.vmem [shape: f32[1,256], index: 4, kind: input, shape index: {}]
  %s5 = inlined_call_operand.hbm [shape: f32[256,128], index: 5, kind: input, shape index: {}]
  %s6 = inlined_call_operand.vmem [shape: f32[1,128], index: 6, kind: input, shape index: {}]
  %s7 = inlined_call_operand.vmem [shape: f32[1,128], index: 7, kind: input, shape index: {}]
  %s8 = inlined_call_operand.vmem [shape: f32[1,128], index: 8, kind: input, shape index: {}]
  %s9 = inlined_call_operand.hbm [shape: f32[128,128], index: 9, kind: input, shape index: {}]
  %s10 = inlined_call_operand.vmem [shape: f32[1,128], index: 10, kind: input, shape index: {}]
  %s11 = inlined_call_operand.hbm [shape: f32[8,128], index: 11, kind: output, shape index: {}]
  %s12 = sld [smem:[#allocation0]]
  $region70: #{tpu_custom_call.1} parent=0
    _
  %s14 = ssub.s32 1, %s12
  %s15 = scalar_select 0, %s14, %s12
  $region1: #{tpu_custom_call.1} parent=0
    #allocation2 [shape = 'u8[4096]{0}', space=vmem, size = 0x1000, scoped, tag = 'input window, operand 0, single buffered']
    #allocation3 [shape = 's32[1]{0}', space=sflag, size = 0x4, scoped, tag = 'scoped memory for tpu_custom_call.1']
    #allocation4 [shape = 's32[1]{0}', space=sflag, size = 0x4, scoped, tag = 'scoped memory for tpu_custom_call.1']
    #allocation5 [shape = 'u8[131072]{0}', space=vmem, size = 0x20000, scoped, tag = 'input window, operand 1, single buffered']
    #allocation6 [shape = 's32[1]{0}', space=sflag, size = 0x4, scoped, tag = 'scoped memory for tpu_custom_call.1']
    #allocation7 [shape = 'u8[131072]{0}', space=vmem, size = 0x20000, scoped, tag = 'input window, operand 5, single buffered']
    #allocation8 [shape = 'u8[65536]{0}', space=vmem, size = 0x10000, scoped, tag = 'input window, operand 9, single buffered']
    #allocation9 [shape = 's32[1]{0}', space=sflag, size = 0x4, scoped, tag = 'scoped memory for tpu_custom_call.1']
    #allocation10 [shape = 'u8[4096]{0}', space=vmem, size = 0x1000, scoped, tag = 'output window, operand 0, single buffered']
    %16 = vsyncpa [#allocation3], 0
    %17 = vsyncpa [#allocation6], 0
    %18 = vsyncpa [#allocation9], 0
    %19 = vsyncpa [#allocation4], 0
    // Predicated region
    $region2: #{tpu_custom_call.1} parent=1 // pred_check
      _
    $region3: #{tpu_custom_call.1} parent=1 // pred_check_branch
      %21 = sbr.rel (0) target = $region5
    $region4: #{tpu_custom_call.1} parent=1 // pred_region
      %s23 = ssub.s32 128, 128
      %24 = vsyncadd [#allocation3], %s23
      %s26 = sshll.u32 [#allocation2], 4
      %s27 = int_to_ptr.vmem [resolvable:$true] %s26
      %29 = dma.hbm_to_vmem [thread:$0]  %s0, 128, %s27, [#allocation3]
    $region5: #{tpu_custom_call.1} parent=1 // pred_fallthru
      _
    // Predicated region
    $region6: #{tpu_custom_call.1} parent=1 // pred_check
      _
    $region7: #{tpu_custom_call.1} parent=1 // pred_check_branch
      %31 = sbr.rel (0) target = $region9
    $region8: #{tpu_custom_call.1} parent=1 // pred_region
      %s33 = ssub.s32 4096, 4096
      %34 = vsyncadd [#allocation6], %s33
      %s35 = sshll.u32 [#allocation5], 4
      %s36 = int_to_ptr.vmem [resolvable:$true] %s35
      %41 = dma.hbm_to_vmem [thread:$0]  %s1, 4096, %s36, [#allocation6], 256, 256, 16
    $region9: #{tpu_custom_call.1} parent=1 // pred_fallthru
      _
    // Predicated region
    $region10: #{tpu_custom_call.1} parent=1 // pred_check
      _
    $region11: #{tpu_custom_call.1} parent=1 // pred_check_branch
      %43 = sbr.rel (0) target = $region13
    $region12: #{tpu_custom_call.1} parent=1 // pred_region
      _
    $region13: #{tpu_custom_call.1} parent=1 // pred_fallthru
      _
    // Predicated region
    $region14: #{tpu_custom_call.1} parent=1 // pred_check
      _
    $region15: #{tpu_custom_call.1} parent=1 // pred_check_branch
      %45 = sbr.rel (0) target = $region17
    $region16: #{tpu_custom_call.1} parent=1 // pred_region
      _
    $region17: #{tpu_custom_call.1} parent=1 // pred_fallthru
      _
    // Predicated region
    $region18: #{tpu_custom_call.1} parent=1 // pred_check
      _
    $region19: #{tpu_custom_call.1} parent=1 // pred_check_branch
      %47 = sbr.rel (0) target = $region21
    $region20: #{tpu_custom_call.1} parent=1 // pred_region
      _
    $region21: #{tpu_custom_call.1} parent=1 // pred_fallthru
      _
    // Predicated region
    $region22: #{tpu_custom_call.1} parent=1 // pred_check
      _
    $region23: #{tpu_custom_call.1} parent=1 // pred_check_branch
      %49 = sbr.rel (0) target = $region25
    $region24: #{tpu_custom_call.1} parent=1 // pred_region
      %s51 = ssub.s32 4096, 4096
      %52 = vsyncadd [#allocation6], %s51
      %s53 = sshll.u32 [#allocation7], 4
      %s54 = int_to_ptr.vmem [resolvable:$true] %s53
      %59 = dma.hbm_to_vmem [thread:$0]  %s5, 4096, %s54, [#allocation6], 128, 128, 8
    $region25: #{tpu_custom_call.1} parent=1 // pred_fallthru
      _
    // Predicated region
    $region26: #{tpu_custom_call.1} parent=1 // pred_check
      _
    $region27: #{tpu_custom_call.1} parent=1 // pred_check_branch
      %61 = sbr.rel (0) target = $region29
    $region28: #{tpu_custom_call.1} parent=1 // pred_region
      _
    $region29: #{tpu_custom_call.1} parent=1 // pred_fallthru
      _
    // Predicated region
    $region30: #{tpu_custom_call.1} parent=1 // pred_check
      _
    $region31: #{tpu_custom_call.1} parent=1 // pred_check_branch
      %63 = sbr.rel (0) target = $region33
    $region32: #{tpu_custom_call.1} parent=1 // pred_region
      _
    $region33: #{tpu_custom_call.1} parent=1 // pred_fallthru
      _
    // Predicated region
    $region34: #{tpu_custom_call.1} parent=1 // pred_check
      _
    $region35: #{tpu_custom_call.1} parent=1 // pred_check_branch
      %65 = sbr.rel (0) target = $region37
    $region36: #{tpu_custom_call.1} parent=1 // pred_region
      _
    $region37: #{tpu_custom_call.1} parent=1 // pred_fallthru
      _
    // Predicated region
    $region38: #{tpu_custom_call.1} parent=1 // pred_check
      _
    $region39: #{tpu_custom_call.1} parent=1 // pred_check_branch
      %67 = sbr.rel (0) target = $region41
    $region40: #{tpu_custom_call.1} parent=1 // pred_region
      %s69 = ssub.s32 2048, 2048
      %70 = vsyncadd [#allocation9], %s69
      %s71 = sshll.u32 [#allocation8], 4
      %s72 = int_to_ptr.vmem [resolvable:$true] %s71
      %77 = dma.hbm_to_vmem [thread:$0]  %s9, 2048, %s72, [#allocation9], 128, 128, 8
    $region41: #{tpu_custom_call.1} parent=1 // pred_fallthru
      _
    // Predicated region
    $region42: #{tpu_custom_call.1} parent=1 // pred_check
      _
    $region43: #{tpu_custom_call.1} parent=1 // pred_check_branch
      %79 = sbr.rel (0) target = $region45
    $region44: #{tpu_custom_call.1} parent=1 // pred_region
      _
    $region45: #{tpu_custom_call.1} parent=1 // pred_fallthru
      _
    // Predicated region
    $region46: #{tpu_custom_call.1} parent=1 // pred_check
      _
    $region47: #{tpu_custom_call.1} parent=1 // pred_check_branch
      %81 = sbr.rel (0) target = $region49
    $region48: #{tpu_custom_call.1} parent=1 // pred_region
      %82 = dma.done [#allocation3], 128
    $region49: #{tpu_custom_call.1} parent=1 // pred_fallthru
      _
    // Predicated region
    $region50: #{tpu_custom_call.1} parent=1 // pred_check
      _
    $region51: #{tpu_custom_call.1} parent=1 // pred_check_branch
      %84 = sbr.rel (0) target = $region53
    $region52: #{tpu_custom_call.1} parent=1 // pred_region
      %85 = dma.done [#allocation6], 4096
    $region53: #{tpu_custom_call.1} parent=1 // pred_fallthru
      _
    // Predicated region
    $region54: #{tpu_custom_call.1} parent=1 // pred_check
      _
    $region55: #{tpu_custom_call.1} parent=1 // pred_check_branch
      %87 = sbr.rel (0) target = $region57
    $region56: #{tpu_custom_call.1} parent=1 // pred_region
      %88 = dma.done [#allocation6], 4096
    $region57: #{tpu_custom_call.1} parent=1 // pred_fallthru
      _
    // Predicated region
    $region58: #{tpu_custom_call.1} parent=1 // pred_check
      _
    $region59: #{tpu_custom_call.1} parent=1 // pred_check_branch
      %90 = sbr.rel (0) target = $region61
    $region60: #{tpu_custom_call.1} parent=1 // pred_region
      %91 = dma.done [#allocation9], 2048
    $region61: #{tpu_custom_call.1} parent=1 // pred_fallthru
      _
    %v92 = vld [vmem:[#allocation2] sm:$0xff]
    %v93 = vld [vmem:[#allocation5] sm:$0xff]
    %v94 = vld [vmem:[#allocation5 + $0x8] sm:$0xff]
    %v95 = vld [vmem:[#allocation5 + $0x10] sm:$0xff]
    %v96 = vld [vmem:[#allocation5 + $0x18] sm:$0xff]
    %v97 = vld [vmem:[#allocation5 + $0x20] sm:$0xff]
    %v98 = vld [vmem:[#allocation5 + $0x28] sm:$0xff]
    %v99 = vld [vmem:[#allocation5 + $0x30] sm:$0xff]
    %v100 = vld [vmem:[#allocation5 + $0x38] sm:$0xff]
    %v101 = vld [vmem:[#allocation5 + $0x40] sm:$0xff]
    %v102 = vld [vmem:[#allocation5 + $0x48] sm:$0xff]
    %v103 = vld [vmem:[#allocation5 + $0x50] sm:$0xff]
    %v104 = vld [vmem:[#allocation5 + $0x58] sm:$0xff]
    %v105 = vld [vmem:[#allocation5 + $0x60] sm:$0xff]
    %v106 = vld [vmem:[#allocation5 + $0x68] sm:$0xff]
    %v107 = vld [vmem:[#allocation5 + $0x70] sm:$0xff]
    %v108 = vld [vmem:[#allocation5 + $0x78] sm:$0xff]
    %v109 = vld [vmem:[#allocation5 + $0x80] sm:$0xff]
    %v110 = vld [vmem:[#allocation5 + $0x88] sm:$0xff]
    %v111 = vld [vmem:[#allocation5 + $0x90] sm:$0xff]
    %v112 = vld [vmem:[#allocation5 + $0x98] sm:$0xff]
    %v113 = vld [vmem:[#allocation5 + $0xa0] sm:$0xff]
    %v114 = vld [vmem:[#allocation5 + $0xa8] sm:$0xff]
    %v115 = vld [vmem:[#allocation5 + $0xb0] sm:$0xff]
    %v116 = vld [vmem:[#allocation5 + $0xb8] sm:$0xff]
    %v117 = vld [vmem:[#allocation5 + $0xc0] sm:$0xff]
    %v118 = vld [vmem:[#allocation5 + $0xc8] sm:$0xff]
    %v119 = vld [vmem:[#allocation5 + $0xd0] sm:$0xff]
    %v120 = vld [vmem:[#allocation5 + $0xd8] sm:$0xff]
    %v121 = vld [vmem:[#allocation5 + $0xe0] sm:$0xff]
    %v122 = vld [vmem:[#allocation5 + $0xe8] sm:$0xff]
    %v123 = vld [vmem:[#allocation5 + $0xf0] sm:$0xff]
    %v124 = vld [vmem:[#allocation5 + $0xf8] sm:$0xff]
    %v125 = vld [vmem:[%s2] sm:$0x3]
    %v127 = vlaneseq
    %v128 = vshrl.u32 %v127, 7
    %v129 = vsub.s32 0, %v128
    %v130 = vrot.slane %v125, %v129
    %v131 = vlaneseq
    %v132 = vshrl.u32 %v131, 7
    %v133 = vsub.s32 1, %v132
    %v134 = vrot.slane %v125, %v133
    %137 = vmatprep.subr.mxu0 %v94
    %138 = vmatpush1.msra.mxu0 %v93
    %139 = vmatprep.subr.mxu0 %v96
    %140 = vmatpush1.msra.mxu0 %v95
    %141 = vmatprep.subr.mxu0 %v98
    %142 = vmatpush1.msra.mxu0 %v97
    %143 = vmatprep.subr.mxu0 %v100
    %144 = vmatpush1.msra.mxu0 %v99
    %145 = vmatprep.subr.mxu0 %v102
    %146 = vmatpush1.msra.mxu0 %v101
    %147 = vmatprep.subr.mxu0 %v104
    %148 = vmatpush1.msra.mxu0 %v103
    %149 = vmatprep.subr.mxu0 %v106
    %150 = vmatpush1.msra.mxu0 %v105
    %151 = vmatprep.subr.mxu0 %v108
    %152 = vmatpush1.msra.mxu0 %v107
    %153 = vmatprep.subr.mxu0 %v110
    %154 = vmatpush1.msra.mxu0 %v109
    %155 = vmatprep.subr.mxu0 %v112
    %156 = vmatpush1.msra.mxu0 %v111
    %157 = vmatprep.subr.mxu0 %v114
    %158 = vmatpush1.msra.mxu0 %v113
    %159 = vmatprep.subr.mxu0 %v116
    %160 = vmatpush1.msra.mxu0 %v115
    %161 = vmatprep.subr.mxu0 %v118
    %162 = vmatpush1.msra.mxu0 %v117
    %163 = vmatprep.subr.mxu0 %v120
    %164 = vmatpush1.msra.mxu0 %v119
    %165 = vmatprep.subr.mxu0 %v122
    %166 = vmatpush1.msra.mxu0 %v121
    %167 = vmatprep.subr.mxu0 %v124
    %168 = vmatpush1.msra.mxu0 %v123
    %169 = vmatprep.subr.mxu0 0.0
    %170 = vmatpush1.msra.mxu0 0.0
    %171 = vmatprep.subr.mxu0 0.0
    %172 = vmatpush1.msra.mxu0 0.0
    %173 = vmatprep.subr.mxu0 0.0
    %174 = vmatpush1.msra.mxu0 0.0
    %175 = vmatprep.subr.mxu0 0.0
    %176 = vmatpush1.msra.mxu0 0.0
    %177 = vmatprep.subr.mxu0 0.0
    %178 = vmatpush1.msra.mxu0 0.0
    %179 = vmatprep.subr.mxu0 0.0
    %180 = vmatpush1.msra.mxu0 0.0
    %181 = vmatprep.subr.mxu0 0.0
    %182 = vmatpush1.msra.mxu0 0.0
    %183 = vmatprep.subr.mxu0 0.0
    %184 = vmatpush1.msra.mxu0 0.0
    %185 = vmatprep.subr.mxu0 0.0
    %186 = vmatpush1.msra.mxu0 0.0
    %187 = vmatprep.subr.mxu0 0.0
    %188 = vmatpush1.msra.mxu0 0.0
    %189 = vmatprep.subr.mxu0 0.0
    %190 = vmatpush1.msra.mxu0 0.0
    %191 = vmatprep.subr.mxu0 0.0
    %192 = vmatpush1.msra.mxu0 0.0
    %193 = vmatprep.subr.mxu0 0.0
    %194 = vmatpush1.msra.mxu0 0.0
    %195 = vmatprep.subr.mxu0 0.0
    %196 = vmatpush1.msra.mxu0 0.0
    %197 = vmatprep.subr.mxu0 0.0
    %198 = vmatpush1.msra.mxu0 0.0
    %199 = vmatprep.subr.mxu0 0.0
    %200 = vmatpush1.msra.mxu0 0.0
    %201 = vmatprep.mubr.f32.mxu0 0.0
    %202 = vmatmul.mubr.f32.gmra.mrb[0].mxu0 %v92
    %v203 = vpop.f32.mrb[0].mxu0
    %v204 = vadd.f32 %v130, %v203
    %v205 = vpop.f32.mrb[0].mxu0
    %v206 = vadd.f32 %v134, %v205
    %207 = vdwg.mxu0
    %v208 = vld [vmem:[%s3] sm:$0x3]
    %v209 = vld [vmem:[%s4] sm:$0x3]
    %v210 = vadd.f32 %v204, %v206
    %211 = vadd.xlane.f32.xlu0 %v210
    %v212 = vpop.xlane.xlu0 %211
    %v213 = vrcp.pop 256.0
    %v214 = vmul.f32 %v212, %v213
    %v215 = vsub.f32 %v204, %v214
    %v216 = vsub.f32 %v206, %v214
    %v217 = vmul.f32 %v215, %v215
    %v218 = vmul.f32 %v216, %v216
    %v219 = vadd.f32 %v217, %v218
    %220 = vadd.xlane.f32.xlu0 %v219
    %v221 = vpop.xlane.xlu0 %220
    %v222 = vmul.f32 %v221, %v213
    %v223 = vadd.f32 %v222, 1e-05
    %v224 = vrsqrt.pop %v223
    %v225 = vmul.f32 %v215, %v224
    %v226 = vmul.f32 %v216, %v224
    %v228 = vlaneseq
    %v229 = vshrl.u32 %v228, 7
    %v230 = vsub.s32 0, %v229
    %v231 = vrot.slane %v208, %v230
    %v232 = vlaneseq
    %v233 = vshrl.u32 %v232, 7
    %v234 = vsub.s32 1, %v233
    %v235 = vrot.slane %v208, %v234
    %v238 = vmul.f32 %v225, %v231
    %v239 = vmul.f32 %v226, %v235
    %v241 = vlaneseq
    %v242 = vshrl.u32 %v241, 7
    %v243 = vsub.s32 0, %v242
    %v244 = vrot.slane %v209, %v243
    %v245 = vlaneseq
    %v246 = vshrl.u32 %v245, 7
    %v247 = vsub.s32 1, %v246
    %v248 = vrot.slane %v209, %v247
    %v251 = vadd.f32 %v238, %v244
    %v252 = vadd.f32 %v239, %v248
    %vm253 = vcmp.gt.f32.partialorder %v251, 0.0
    %vm254 = vcmp.gt.f32.partialorder %v252, 0.0
    %v255 = vmul.f32 %v251, 0.01
    %v256 = vmul.f32 %v252, 0.01
    %v257 = vsel %vm253, %v251, %v255
    %v258 = vsel %vm254, %v252, %v256
    %v259 = vld [vmem:[#allocation7] sm:$0xff]
    %v260 = vld [vmem:[#allocation7 + $0x8] sm:$0xff]
    %v261 = vld [vmem:[#allocation7 + $0x10] sm:$0xff]
    %v262 = vld [vmem:[#allocation7 + $0x18] sm:$0xff]
    %v263 = vld [vmem:[#allocation7 + $0x20] sm:$0xff]
    %v264 = vld [vmem:[#allocation7 + $0x28] sm:$0xff]
    %v265 = vld [vmem:[#allocation7 + $0x30] sm:$0xff]
    %v266 = vld [vmem:[#allocation7 + $0x38] sm:$0xff]
    %v267 = vld [vmem:[#allocation7 + $0x40] sm:$0xff]
    %v268 = vld [vmem:[#allocation7 + $0x48] sm:$0xff]
    %v269 = vld [vmem:[#allocation7 + $0x50] sm:$0xff]
    %v270 = vld [vmem:[#allocation7 + $0x58] sm:$0xff]
    %v271 = vld [vmem:[#allocation7 + $0x60] sm:$0xff]
    %v272 = vld [vmem:[#allocation7 + $0x68] sm:$0xff]
    %v273 = vld [vmem:[#allocation7 + $0x70] sm:$0xff]
    %v274 = vld [vmem:[#allocation7 + $0x78] sm:$0xff]
    %v275 = vld [vmem:[#allocation7 + $0x80] sm:$0xff]
    %v276 = vld [vmem:[#allocation7 + $0x88] sm:$0xff]
    %v277 = vld [vmem:[#allocation7 + $0x90] sm:$0xff]
    %v278 = vld [vmem:[#allocation7 + $0x98] sm:$0xff]
    %v279 = vld [vmem:[#allocation7 + $0xa0] sm:$0xff]
    %v280 = vld [vmem:[#allocation7 + $0xa8] sm:$0xff]
    %v281 = vld [vmem:[#allocation7 + $0xb0] sm:$0xff]
    %v282 = vld [vmem:[#allocation7 + $0xb8] sm:$0xff]
    %v283 = vld [vmem:[#allocation7 + $0xc0] sm:$0xff]
    %v284 = vld [vmem:[#allocation7 + $0xc8] sm:$0xff]
    %v285 = vld [vmem:[#allocation7 + $0xd0] sm:$0xff]
    %v286 = vld [vmem:[#allocation7 + $0xd8] sm:$0xff]
    %v287 = vld [vmem:[#allocation7 + $0xe0] sm:$0xff]
    %v288 = vld [vmem:[#allocation7 + $0xe8] sm:$0xff]
    %v289 = vld [vmem:[#allocation7 + $0xf0] sm:$0xff]
    %v290 = vld [vmem:[#allocation7 + $0xf8] sm:$0xff]
    %v291 = vld [vmem:[%s6] sm:$0x1]
    %v293 = vlaneseq
    %v294 = vshrl.u32 %v293, 7
    %v295 = vsub.s32 0, %v294
    %v296 = vrot.slane %v291, %v295
    %298 = vmatprep.subr.mxu0 0.0
    %299 = vmatpush1.msra.mxu0 %v259
    %300 = vmatprep.subr.mxu0 0.0
    %301 = vmatpush1.msra.mxu0 %v260
    %302 = vmatprep.subr.mxu0 0.0
    %303 = vmatpush1.msra.mxu0 %v261
    %304 = vmatprep.subr.mxu0 0.0
    %305 = vmatpush1.msra.mxu0 %v262
    %306 = vmatprep.subr.mxu0 0.0
    %307 = vmatpush1.msra.mxu0 %v263
    %308 = vmatprep.subr.mxu0 0.0
    %309 = vmatpush1.msra.mxu0 %v264
    %310 = vmatprep.subr.mxu0 0.0
    %311 = vmatpush1.msra.mxu0 %v265
    %312 = vmatprep.subr.mxu0 0.0
    %313 = vmatpush1.msra.mxu0 %v266
    %314 = vmatprep.subr.mxu0 0.0
    %315 = vmatpush1.msra.mxu0 %v267
    %316 = vmatprep.subr.mxu0 0.0
    %317 = vmatpush1.msra.mxu0 %v268
    %318 = vmatprep.subr.mxu0 0.0
    %319 = vmatpush1.msra.mxu0 %v269
    %320 = vmatprep.subr.mxu0 0.0
    %321 = vmatpush1.msra.mxu0 %v270
    %322 = vmatprep.subr.mxu0 0.0
    %323 = vmatpush1.msra.mxu0 %v271
    %324 = vmatprep.subr.mxu0 0.0
    %325 = vmatpush1.msra.mxu0 %v272
    %326 = vmatprep.subr.mxu0 0.0
    %327 = vmatpush1.msra.mxu0 %v273
    %328 = vmatprep.subr.mxu0 0.0
    %329 = vmatpush1.msra.mxu0 %v274
    %330 = vmatprep.subr.mxu0 0.0
    %331 = vmatpush1.msra.mxu0 %v275
    %332 = vmatprep.subr.mxu0 0.0
    %333 = vmatpush1.msra.mxu0 %v276
    %334 = vmatprep.subr.mxu0 0.0
    %335 = vmatpush1.msra.mxu0 %v277
    %336 = vmatprep.subr.mxu0 0.0
    %337 = vmatpush1.msra.mxu0 %v278
    %338 = vmatprep.subr.mxu0 0.0
    %339 = vmatpush1.msra.mxu0 %v279
    %340 = vmatprep.subr.mxu0 0.0
    %341 = vmatpush1.msra.mxu0 %v280
    %342 = vmatprep.subr.mxu0 0.0
    %343 = vmatpush1.msra.mxu0 %v281
    %344 = vmatprep.subr.mxu0 0.0
    %345 = vmatpush1.msra.mxu0 %v282
    %346 = vmatprep.subr.mxu0 0.0
    %347 = vmatpush1.msra.mxu0 %v283
    %348 = vmatprep.subr.mxu0 0.0
    %349 = vmatpush1.msra.mxu0 %v284
    %350 = vmatprep.subr.mxu0 0.0
    %351 = vmatpush1.msra.mxu0 %v285
    %352 = vmatprep.subr.mxu0 0.0
    %353 = vmatpush1.msra.mxu0 %v286
    %354 = vmatprep.subr.mxu0 0.0
    %355 = vmatpush1.msra.mxu0 %v287
    %356 = vmatprep.subr.mxu0 0.0
    %357 = vmatpush1.msra.mxu0 %v288
    %358 = vmatprep.subr.mxu0 0.0
    %359 = vmatpush1.msra.mxu0 %v289
    %360 = vmatprep.subr.mxu0 0.0
    %361 = vmatpush1.msra.mxu0 %v290
    %362 = vmatprep.mubr.f32.mxu0 %v258
    %363 = vmatmul.mubr.f32.gmra.mrb[0].mxu0 %v257
    %v364 = vpop.f32.mrb[0].mxu0
    %v365 = vadd.f32 %v296, %v364
    %v366 = vpop.f32.mrb[0].mxu0
    %367 = vdwg.mxu0
    %v368 = vld [vmem:[%s7] sm:$0x1]
    %v369 = vld [vmem:[%s8] sm:$0x1]
    %370 = vadd.xlane.f32.xlu0 %v365
    %v371 = vpop.xlane.xlu0 %370
    %v372 = vrcp.pop 128.0
    %v373 = vmul.f32 %v371, %v372
    %v374 = vsub.f32 %v365, %v373
    %v375 = vmul.f32 %v374, %v374
    %376 = vadd.xlane.f32.xlu0 %v375
    %v377 = vpop.xlane.xlu0 %376
    %v378 = vmul.f32 %v377, %v372
    %v379 = vadd.f32 %v378, 1e-05
    %v380 = vrsqrt.pop %v379
    %v381 = vmul.f32 %v374, %v380
    %v383 = vlaneseq
    %v384 = vshrl.u32 %v383, 7
    %v385 = vsub.s32 0, %v384
    %v386 = vrot.slane %v368, %v385
    %v388 = vmul.f32 %v381, %v386
    %v390 = vlaneseq
    %v391 = vshrl.u32 %v390, 7
    %v392 = vsub.s32 0, %v391
    %v393 = vrot.slane %v369, %v392
    %v395 = vadd.f32 %v388, %v393
    %vm396 = vcmp.gt.f32.partialorder %v395, 0.0
    %v397 = vmul.f32 %v395, 0.01
    %v398 = vsel %vm396, %v395, %v397
    %v399 = vld [vmem:[#allocation8] sm:$0xff]
    %v400 = vld [vmem:[#allocation8 + $0x8] sm:$0xff]
    %v401 = vld [vmem:[#allocation8 + $0x10] sm:$0xff]
    %v402 = vld [vmem:[#allocation8 + $0x18] sm:$0xff]
    %v403 = vld [vmem:[#allocation8 + $0x20] sm:$0xff]
    %v404 = vld [vmem:[#allocation8 + $0x28] sm:$0xff]
    %v405 = vld [vmem:[#allocation8 + $0x30] sm:$0xff]
    %v406 = vld [vmem:[#allocation8 + $0x38] sm:$0xff]
    %v407 = vld [vmem:[#allocation8 + $0x40] sm:$0xff]
    %v408 = vld [vmem:[#allocation8 + $0x48] sm:$0xff]
    %v409 = vld [vmem:[#allocation8 + $0x50] sm:$0xff]
    %v410 = vld [vmem:[#allocation8 + $0x58] sm:$0xff]
    %v411 = vld [vmem:[#allocation8 + $0x60] sm:$0xff]
    %v412 = vld [vmem:[#allocation8 + $0x68] sm:$0xff]
    %v413 = vld [vmem:[#allocation8 + $0x70] sm:$0xff]
    %v414 = vld [vmem:[#allocation8 + $0x78] sm:$0xff]
    %v415 = vld [vmem:[%s10] sm:$0x1]
    %v417 = vlaneseq
    %v418 = vshrl.u32 %v417, 7
    %v419 = vsub.s32 0, %v418
    %v420 = vrot.slane %v415, %v419
    %422 = vmatprep.subr.mxu0 0.0
    %423 = vmatpush1.msra.mxu0 %v399
    %424 = vmatprep.subr.mxu0 0.0
    %425 = vmatpush1.msra.mxu0 %v400
    %426 = vmatprep.subr.mxu0 0.0
    %427 = vmatpush1.msra.mxu0 %v401
    %428 = vmatprep.subr.mxu0 0.0
    %429 = vmatpush1.msra.mxu0 %v402
    %430 = vmatprep.subr.mxu0 0.0
    %431 = vmatpush1.msra.mxu0 %v403
    %432 = vmatprep.subr.mxu0 0.0
    %433 = vmatpush1.msra.mxu0 %v404
    %434 = vmatprep.subr.mxu0 0.0
    %435 = vmatpush1.msra.mxu0 %v405
    %436 = vmatprep.subr.mxu0 0.0
    %437 = vmatpush1.msra.mxu0 %v406
    %438 = vmatprep.subr.mxu0 0.0
    %439 = vmatpush1.msra.mxu0 %v407
    %440 = vmatprep.subr.mxu0 0.0
    %441 = vmatpush1.msra.mxu0 %v408
    %442 = vmatprep.subr.mxu0 0.0
    %443 = vmatpush1.msra.mxu0 %v409
    %444 = vmatprep.subr.mxu0 0.0
    %445 = vmatpush1.msra.mxu0 %v410
    %446 = vmatprep.subr.mxu0 0.0
    %447 = vmatpush1.msra.mxu0 %v411
    %448 = vmatprep.subr.mxu0 0.0
    %449 = vmatpush1.msra.mxu0 %v412
    %450 = vmatprep.subr.mxu0 0.0
    %451 = vmatpush1.msra.mxu0 %v413
    %452 = vmatprep.subr.mxu0 0.0
    %453 = vmatpush1.msra.mxu0 %v414
    %454 = vmatprep.subr.mxu0 0.0
    %455 = vmatpush1.msra.mxu0 0.0
    %456 = vmatprep.subr.mxu0 0.0
    %457 = vmatpush1.msra.mxu0 0.0
    %458 = vmatprep.subr.mxu0 0.0
    %459 = vmatpush1.msra.mxu0 0.0
    %460 = vmatprep.subr.mxu0 0.0
    %461 = vmatpush1.msra.mxu0 0.0
    %462 = vmatprep.subr.mxu0 0.0
    %463 = vmatpush1.msra.mxu0 0.0
    %464 = vmatprep.subr.mxu0 0.0
    %465 = vmatpush1.msra.mxu0 0.0
    %466 = vmatprep.subr.mxu0 0.0
    %467 = vmatpush1.msra.mxu0 0.0
    %468 = vmatprep.subr.mxu0 0.0
    %469 = vmatpush1.msra.mxu0 0.0
    %470 = vmatprep.subr.mxu0 0.0
    %471 = vmatpush1.msra.mxu0 0.0
    %472 = vmatprep.subr.mxu0 0.0
    %473 = vmatpush1.msra.mxu0 0.0
    %474 = vmatprep.subr.mxu0 0.0
    %475 = vmatpush1.msra.mxu0 0.0
    %476 = vmatprep.subr.mxu0 0.0
    %477 = vmatpush1.msra.mxu0 0.0
    %478 = vmatprep.subr.mxu0 0.0
    %479 = vmatpush1.msra.mxu0 0.0
    %480 = vmatprep.subr.mxu0 0.0
    %481 = vmatpush1.msra.mxu0 0.0
    %482 = vmatprep.subr.mxu0 0.0
    %483 = vmatpush1.msra.mxu0 0.0
    %484 = vmatprep.subr.mxu0 0.0
    %485 = vmatpush1.msra.mxu0 0.0
    %486 = vmatprep.mubr.f32.mxu0 0.0
    %487 = vmatmul.mubr.f32.gmra.mrb[0].mxu0 %v398
    %v488 = vpop.f32.mrb[0].mxu0
    %v489 = vadd.f32 %v420, %v488
    %v490 = vpop.f32.mrb[0].mxu0
    %491 = vdwg.mxu0
    %492 = vst [vmem:[#allocation10] sm:$0xff] %v489
    // Predicated region
    $region62: #{tpu_custom_call.1} parent=1 // pred_check
      _
    $region63: #{tpu_custom_call.1} parent=1 // pred_check_branch
      %494 = sbr.rel (0) target = $region65
    $region64: #{tpu_custom_call.1} parent=1 // pred_region
      %s496 = ssub.s32 128, 128
      %497 = vsyncadd [#allocation4], %s496
      %s499 = sshll.u32 [#allocation10], 4
      %s500 = int_to_ptr.vmem [resolvable:$true] %s499
      %502 = dma.vmem_to_hbm [thread:$0]  %s500, 128, %s11, [#allocation4]
    $region65: #{tpu_custom_call.1} parent=1 // pred_fallthru
      _
    // Predicated region
    $region66: #{tpu_custom_call.1} parent=1 // pred_check
      _
    $region67: #{tpu_custom_call.1} parent=1 // pred_check_branch
      %504 = sbr.rel (0) target = $region69
    $region68: #{tpu_custom_call.1} parent=1 // pred_region
      %505 = dma.done [#allocation4], 128
    $region69: #{tpu_custom_call.1} parent=1 // pred_fallthru
      _
    %506 = vsyncpa [#allocation3], 1
    %507 = vsyncpa [#allocation6], 1
    %508 = vsyncpa [#allocation9], 1
    %509 = vsyncpa [#allocation4], 1

</llo_original>
